<compile_context>
chip_gen: v7x
topology: tpu7x:2x2x1
jax: 0.10.0
libtpu: 0.0.40
codegen_flags: <defaults>
</compile_context>

<pallas_src>
import numpy as np
import jax
import jax.numpy as jnp
from jax import lax
from jax.experimental import pallas as pl
from jax.experimental.pallas import tpu as pltpu

BN_EPS = 1e-5


# ------------------------------------------------------------------
# align_corners=True bilinear interpolation matrix (n_out, n_in)
# ------------------------------------------------------------------
def _bilinear_matrix(n_in, n_out):
    m = np.zeros((n_out, n_in), np.float32)
    if n_out == 1 or n_in == 1:
        m[:, 0] = 1.0
        return m
    for i in range(n_out):
        src = i * (n_in - 1) / (n_out - 1)          # align_corners=True mapping
        i0 = min(int(np.floor(src)), n_in - 2)
        w = src - i0
        m[i, i0] += 1.0 - w
        m[i, i0 + 1] += w
    return m


# ------------------------------------------------------------------
# Kernel 1: fused  Conv3x3(pad=1, no bias) + BN + ReLU + bilinear upsample
#   per batch element:
#     - zero-halo the input tile in a VMEM scratch (no jnp.pad HBM pass)
#     - im2col slab (H*W, 9*Cin)  ->  ONE MXU matmul with K = 9*Cin
#     - BN/ReLU epilogue in f32
#     - separable upsample:  rows=(c,h):  (C*H, W) @ MwT  then a batched
#       matmul over C with Mh  ->  (C, Ho, Wo)  stored directly in NCHW order
# ------------------------------------------------------------------
def _convbn_up_kernel(x_ref, w_ref, scale_ref, shift_ref, mwT_ref, mhb_ref,
                      o_ref, xp_ref):
    # x_ref    : (1, H, W, Cin)      NHWC input tile
    # w_ref    : (9*Cin, Cout)       conv weight, tap-major rows
    # scale/shift : (1, Cout)        folded BatchNorm affine
    # mwT_ref  : (W, Wo)             Mw^T
    # mhb_ref  : (Cout, Ho, H)       Mh broadcast over channels (BMM lhs)
    # o_ref    : (1, Cout, Ho, Wo)   NCHW output tile
    # xp_ref   : (H+2, W+2, Cin)     VMEM scratch for the 1-px halo
    H, W, Cin = x_ref.shape[1], x_ref.shape[2], x_ref.shape[3]
    Cout = o_ref.shape[1]
    Wo = mwT_ref.shape[1]

    # ---- in-kernel halo (replaces wrapper jnp.pad) ----
    xp_ref[...] = jnp.zeros(xp_ref.shape, xp_ref.dtype)
    xp_ref[1:H + 1, 1:W + 1, :] = x_ref[0].astype(jnp.float32)

    # ---- im2col: one (H*W, 9*Cin) slab -> single MXU matmul ----
    taps = []
    for dy in range(3):
        for dx in range(3):
            taps.append(xp_ref[dy:dy + H, dx:dx + W, :].reshape(H * W, Cin))
    patches = jnp.concatenate(taps, axis=-1)                        # (H*W, 9*Cin)

    conv = jnp.dot(patches, w_ref[...], preferred_element_type=jnp.float32)
    conv = jnp.maximum(conv * scale_ref[...] + shift_ref[...], 0.0)  # (H*W, Cout)

    # ---- separable bilinear upsample (align_corners=True) ----
    #   out[c, ho, wo] = sum_{h,w} Mh[ho,h] * Mw[wo,w] * conv[(h,w), c]
    ct = conv.T.reshape(Cout * H, W)                                 # rows = (c, h)
    r1 = jnp.dot(ct, mwT_ref[...], preferred_element_type=jnp.float32)   # (C*H, Wo)
    r1 = r1.reshape(Cout, H, Wo)
    out = lax.dot_general(                                            # batched over C
        mhb_ref[...], r1,
        dimension_numbers=(((2,), (1,)), ((0,), (0,))),
        preferred_element_type=jnp.float32)                           # (Cout, Ho, Wo)
    o_ref[...] = out[None].astype(o_ref.dtype)


def convbnrelu_upsample_nchw(x_nchw, w_oihw, gamma, beta, run_mean, run_var,
                             scale_factor):
    N, Cin, H, W = x_nchw.shape
    Cout = w_oihw.shape[0]
    Ho, Wo = H * scale_factor, W * scale_factor

    x_nhwc = jnp.transpose(x_nchw, (0, 2, 3, 1))
    # (O, I, 3, 3) -> (ky, kx, I, O) -> (9*I, O), tap-major to match the im2col order
    w_mat = jnp.transpose(w_oihw, (2, 3, 1, 0)).reshape(9 * Cin, Cout)

    inv_std = 1.0 / jnp.sqrt(run_var + BN_EPS)
    scale = (gamma * inv_std).reshape(1, Cout)
    shift = (beta - run_mean * gamma * inv_std).reshape(1, Cout)

    mh = _bilinear_matrix(H, Ho)                                      # (Ho, H)
    mw = _bilinear_matrix(W, Wo)                                      # (Wo, W)
    mwT = jnp.asarray(mw.T)                                           # (W, Wo)
    mhb = jnp.broadcast_to(jnp.asarray(mh)[None], (Cout, Ho, H))      # (Cout, Ho, H)

    out = pl.pallas_call(
        _convbn_up_kernel,
        out_shape=jax.ShapeDtypeStruct((N, Cout, Ho, Wo), x_nchw.dtype),
        grid_spec=pltpu.PrefetchScalarGridSpec(
            num_scalar_prefetch=0,
            grid=(N,),
            in_specs=[
                pl.BlockSpec((1, H, W, Cin), lambda n: (n, 0, 0, 0)),
                pl.BlockSpec((9 * Cin, Cout), lambda n: (0, 0)),
                pl.BlockSpec((1, Cout), lambda n: (0, 0)),
                pl.BlockSpec((1, Cout), lambda n: (0, 0)),
                pl.BlockSpec((W, Wo), lambda n: (0, 0)),
                pl.BlockSpec((Cout, Ho, H), lambda n: (0, 0, 0)),
            ],
            out_specs=pl.BlockSpec((1, Cout, Ho, Wo), lambda n: (n, 0, 0, 0)),
            scratch_shapes=[pltpu.VMEM((H + 2, W + 2, Cin), jnp.float32)],
        ),
        compiler_params=pltpu.CompilerParams(dimension_semantics=("parallel",)),
    )(x_nhwc, w_mat, scale, shift, mwT, mhb)
    return out, jnp.asarray(mh), jnp.asarray(mw)


# ------------------------------------------------------------------
# Kernel 2: softmax over the class axis  (F.softmax(x, dim=1))
#   computed in (N, K, H*W) layout: classes on sublanes, H*W lane-dense,
#   no NCHW<->NHWC transposes in the wrapper (reshapes are metadata only).
# ------------------------------------------------------------------
def _softmax_c_kernel(p_ref, o_ref):
    x = p_ref[0].astype(jnp.float32)                 # (K, H*W)
    m = jnp.max(x, axis=0, keepdims=True)
    e = jnp.exp(x - m)
    s = jnp.sum(e, axis=0, keepdims=True)
    o_ref[...] = (e * pl.reciprocal(s, approx=False))[None].astype(o_ref.dtype)


def softmax_channels_nchw(p_nchw):
    N, K, H, W = p_nchw.shape
    p2 = p_nchw.reshape(N, K, H * W)
    out = pl.pallas_call(
        _softmax_c_kernel,
        out_shape=jax.ShapeDtypeStruct((N, K, H * W), p_nchw.dtype),
        grid_spec=pltpu.PrefetchScalarGridSpec(
            num_scalar_prefetch=0,
            grid=(N,),
            in_specs=[pl.BlockSpec((1, K, H * W), lambda n: (n, 0, 0))],
            out_specs=pl.BlockSpec((1, K, H * W), lambda n: (n, 0, 0)),
        ),
        compiler_params=pltpu.CompilerParams(dimension_semantics=("parallel",)),
    )(p2)
    return out.reshape(N, K, H, W)


# ------------------------------------------------------------------
# Demo / correctness check
# ------------------------------------------------------------------
if __name__ == "__main__":
    key = jax.random.PRNGKey(0)
    k1, k2, k3, k4, k5 = jax.random.split(key, 5)

    # Synthetic shapes consistent with the module:
    #   encoder_channels[0] = 32, patch_size (in_stride) = 4, 6 classes, spatial 16
    N, C0, H, W = 2, 32, 16, 16
    NUM_CLASSES = 6
    PATCH = 4

    con_x = jax.random.normal(k1, (N, C0, H, W), jnp.float32)          # decoder con_x
    predictions = jax.random.normal(k2, (N, NUM_CLASSES, H, W), jnp.float32)

    # ConvBNReLU parameters (deterministic synthetic init)
    w_conv = 0.1 * jax.random.normal(k3, (C0, C0, 3, 3), jnp.float32)   # Conv2d (OIHW)
    gamma = 1.0 + 0.05 * jax.random.normal(k4, (C0,), jnp.float32)      # BN weight
    beta = 0.05 * jax.random.normal(k5, (C0,), jnp.float32)             # BN bias
    run_mean = 0.01 * jnp.arange(C0, dtype=jnp.float32)                 # BN running_mean
    run_var = jnp.ones((C0,), jnp.float32)                              # BN running_var

    # ---- Pallas path: the defined compute of `contrastive()` prologue ----
    soft_preds = softmax_channels_nchw(predictions)
    up_out, mh, mw = convbnrelu_upsample_nchw(
        con_x, w_conv, gamma, beta, run_mean, run_var, PATCH)

    soft_preds, up_out = jax.block_until_ready((soft_preds, up_out))

    # ---- References (plain JAX) ----
    soft_ref = jax.nn.softmax(predictions, axis=1)

    y_ref = lax.conv_general_dilated(
        con_x, w_conv, window_strides=(1, 1), padding=((1, 1), (1, 1)),
        dimension_numbers=("NCHW", "OIHW", "NCHW"),
        precision=lax.Precision.HIGHEST)
    sc = gamma / jnp.sqrt(run_var + BN_EPS)
    y_ref = y_ref * sc[None, :, None, None] + (beta - run_mean * sc)[None, :, None, None]
    conv_ref = jnp.maximum(y_ref, 0.0)
    up_ref = jnp.einsum("nchw,oh,pw->ncop", conv_ref, mh, mw)

    np.testing.assert_allclose(np.asarray(soft_preds), np.asarray(soft_ref),
                               rtol=1e-3, atol=1e-5)
    np.testing.assert_allclose(np.asarray(up_out), np.asarray(up_ref),
                               rtol=2e-2, atol=2e-2)

    print("KERNEL_OK")
</pallas_src>

<mosaic_0001>
module attributes {stable_mosaic.version = 11 : i64} {
  func.func @_softmax_c_kernel(%arg0: i32, %arg1: memref<1x6x256xf32, #tpu.memory_space<vmem>>, %arg2: memref<1x6x256xf32, #tpu.memory_space<vmem>>) attributes {dimension_semantics = [#tpu.dimension_semantics<parallel>], iteration_bounds = array<i64: 2>, scalar_prefetch = 0 : i64, scratch_operands = 0 : i64, tpu.core_type = #tpu.core_type<tc>, window_params = [{transform_indices = @transform_0, window_bounds = array<i64: 1, 6, 256>}, {transform_indices = @transform_1, window_bounds = array<i64: 1, 6, 256>}]} {
    %c0 = arith.constant 0 : index
    %c0_0 = arith.constant 0 : index
    %c0_1 = arith.constant 0 : index
    %0 = vector.load %arg1[%c0, %c0_0, %c0_1] : memref<1x6x256xf32, #tpu.memory_space<vmem>>, vector<1x6x256xf32>
    %1 = vector.shape_cast %0 : vector<1x6x256xf32> to vector<6x256xf32>
    %cst = arith.constant dense<0xFF800000> : vector<256xf32>
    %2 = vector.multi_reduction <maximumf>, %1, %cst [0] : vector<6x256xf32> to vector<256xf32>
    %3 = vector.shape_cast %2 : vector<256xf32> to vector<1x256xf32>
    %4 = vector.broadcast %3 : vector<1x256xf32> to vector<6x256xf32>
    %5 = arith.subf %1, %4 : vector<6x256xf32>
    %6 = math.exp %5 : vector<6x256xf32>
    %cst_2 = arith.constant dense<0.000000e+00> : vector<256xf32>
    %7 = vector.multi_reduction <add>, %6, %cst_2 [0] : vector<6x256xf32> to vector<256xf32>
    %8 = vector.shape_cast %7 : vector<256xf32> to vector<1x256xf32>
    %9 = tpu.reciprocal %8 : vector<1x256xf32> -> vector<1x256xf32>
    %10 = vector.broadcast %9 : vector<1x256xf32> to vector<6x256xf32>
    %11 = arith.mulf %6, %10 : vector<6x256xf32>
    %12 = vector.shape_cast %11 : vector<6x256xf32> to vector<1x6x256xf32>
    %c0_3 = arith.constant 0 : index
    %c0_4 = arith.constant 0 : index
    %c0_5 = arith.constant 0 : index
    %13 = vector.load %arg2[%c0_3, %c0_4, %c0_5] : memref<1x6x256xf32, #tpu.memory_space<vmem>>, vector<1x6x256xf32>
    tpu.vector_store %arg2[%c0_3, %c0_4, %c0_5], %12 {strides = array<i32>} : memref<1x6x256xf32, #tpu.memory_space<vmem>>, vector<1x6x256xf32>,
    return
  }
  func.func @transform_0(%arg0: i32) -> (i32, i32, i32) {
    %c0_i32 = arith.constant 0 : i32
    %c0_i32_0 = arith.constant 0 : i32
    %c0_i32_1 = arith.constant 0 : i32
    return %arg0, %c0_i32, %c0_i32_0 : i32, i32, i32
  }
  func.func @transform_1(%arg0: i32) -> (i32, i32, i32) {
    %c0_i32 = arith.constant 0 : i32
    %c0_i32_0 = arith.constant 0 : i32
    %c0_i32_1 = arith.constant 0 : i32
    return %arg0, %c0_i32, %c0_i32_0 : i32, i32, i32
  }
}

</mosaic_0001>

<llo_original>
// kernel: tpu_custom_call.1
$region0: #{tpu_custom_call.1}
  #allocation0 [shape = 'u32[]', space=smem, size = 0x4, offset = 0x4, fixed_abs, tag = 'smem constant byte address 0x4 - core index']
  #allocation1 [shape = 'u32[144,128]{1,0:T(1,128)}', space=vmem, size = 0x12000, scoped, tag = 'internal scratch']
  %s0 = inlined_call_operand.vmem [shape: f32[2,6,256], index: 0, kind: input, shape index: {}]
  %s1 = inlined_call_operand.vmem [shape: f32[2,6,256], index: 1, kind: output, shape index: {}]
  %s2 = sld [smem:[#allocation0]]
  $region37: #{tpu_custom_call.1} parent=0
    _
  %s4 = ssub.s32 1, %s2
  %s5 = scalar_select 0, %s4, %s2
  loop: start=0, step=1, limit=4
  $region2: #{tpu_custom_call.1} parent=0 // loop_pre_header
    _
  $region3: #{tpu_custom_call.1} parent=0 // loop_header
    %s7 = sphi 0, %s11
    %p8 = scmp.ge.s32.totalorder %s7, 4
    %s17 = sphi 0, %s19
    %s20 = sphi 0, %s17
    %s21 = sphi 0, %s20
    %s37 = sphi 0, %s21
    %s43 = sphi 0, %s45
    %s46 = sphi 0, %s43
    %s47 = sphi 0, %s46
    %s63 = sphi 0, %s47
  $region4: #{tpu_custom_call.1} parent=0 // loop_header_branch
    %10 = sbr.rel (%p8) target = $region8
  $region5: #{tpu_custom_call.1} parent=0 // loop_body
    %s12 = ssub.s32 %s7, 1
    %s13 = ssub.s32 %s7, 2
    %s14 = sadd.s32 %s7, 1
    %s15 = ssub.s32 %s7, %s14
    %p16 = scmp.eq.s32.totalorder %s15, 0
    %s18 = sadd.s32 %s17, 1
    %s19 = scalar_select %p16, %s17, %s18
    %p22 = pneg %p16
    %p23 = scmp.eq.s32.totalorder %s7, 1
    %p24 = por %p22, %p23
    %p25 = scmp.ne.s32.totalorder %s17, %s20
    %p26 = scmp.eq.s32.totalorder %s7, 0
    %p27 = por %p25, %p26
    %p28 = scmp.ne.s32.totalorder %s17, %s20
    %p29 = scmp.eq.s32.totalorder %s12, 1
    %p30 = por %p28, %p29
    %p31 = scmp.ne.s32.totalorder %s20, %s21
    %p32 = scmp.eq.s32.totalorder %s12, 0
    %p33 = por %p31, %p32
    %p34 = scmp.ne.s32.totalorder %s20, %s21
    %p35 = scmp.eq.s32.totalorder %s13, 1
    %p36 = por %p34, %p35
    %p38 = scmp.ne.s32.totalorder %s21, %s37
    %p39 = scmp.eq.s32.totalorder %s13, 0
    %p40 = por %p38, %p39
    %s41 = ssub.s32 %s7, %s14
    %p42 = scmp.eq.s32.totalorder %s41, 0
    %s44 = sadd.s32 %s43, 1
    %s45 = scalar_select %p42, %s43, %s44
    %p48 = pneg %p42
    %p49 = scmp.eq.s32.totalorder %s7, 1
    %p50 = por %p48, %p49
    %p51 = scmp.ne.s32.totalorder %s43, %s46
    %p52 = scmp.eq.s32.totalorder %s7, 0
    %p53 = por %p51, %p52
    %p54 = scmp.ne.s32.totalorder %s43, %s46
    %p55 = scmp.eq.s32.totalorder %s12, 1
    %p56 = por %p54, %p55
    %p57 = scmp.ne.s32.totalorder %s46, %s47
    %p58 = scmp.eq.s32.totalorder %s12, 0
    %p59 = por %p57, %p58
    %p60 = scmp.ne.s32.totalorder %s46, %s47
    %p61 = scmp.eq.s32.totalorder %s13, 1
    %p62 = por %p60, %p61
    %p64 = scmp.ne.s32.totalorder %s47, %s63
    %p65 = scmp.eq.s32.totalorder %s13, 0
    %p66 = por %p64, %p65
    %p67 = scmp.le.s32.totalorder 1, %s7
    %p68 = scmp.lt.s32.totalorder %s7, 3
    %p69 = pnand %p67, %p68
    %p70 = pneg %p69
    // Predicated region
    $region9: #{tpu_custom_call.1} parent=5 // pred_check
      _
    $region10: #{tpu_custom_call.1} parent=5 // pred_check_branch
      %72 = sbr.rel (%p69) target = $region12
    $region11: #{tpu_custom_call.1} parent=5 // pred_region
      %s73 = ssub.s32 %s7, 1
    $region12: #{tpu_custom_call.1} parent=5 // pred_fallthru
      _
    %p74 = scmp.lt.s32.totalorder %s7, 2
    // Predicated region
    $region13: #{tpu_custom_call.1} parent=5 // pred_check
      %p75 = pneg %p74
    $region14: #{tpu_custom_call.1} parent=5 // pred_check_branch
      %77 = sbr.rel (%p75) target = $region16
    $region15: #{tpu_custom_call.1} parent=5 // pred_region
      // Predicated region
      $region17: #{tpu_custom_call.1} parent=15 // pred_check
        %p78 = pneg %p27
      $region18: #{tpu_custom_call.1} parent=15 // pred_check_branch
        %80 = sbr.rel (%p78) target = $region20
      $region19: #{tpu_custom_call.1} parent=15 // pred_region
        %p81 = scmp.lt.s32.totalorder %s7, 1
        %s82 = scalar_select %p81, %s7, 1
        %s83 = smul.addr %s82, 2
        %s84 = smul.addr %s83, 8
        %s85 = scalar_lea.vmem %s0, %s84
      $region20: #{tpu_custom_call.1} parent=15 // pred_fallthru
        _
    $region16: #{tpu_custom_call.1} parent=5 // pred_fallthru
      _
    %p86 = scmp.le.s32.totalorder 1, %s7
    %p87 = scmp.lt.s32.totalorder %s7, 3
    %p88 = pnand %p86, %p87
    %p89 = pneg %p88
    // Predicated region
    $region21: #{tpu_custom_call.1} parent=5 // pred_check
      _
    $region22: #{tpu_custom_call.1} parent=5 // pred_check_branch
      %91 = sbr.rel (%p88) target = $region24
    $region23: #{tpu_custom_call.1} parent=5 // pred_region
      %s92 = ssub.s32 %s7, 1
      %p93 = scmp.lt.s32.totalorder %s12, 1
      %s94 = scalar_select %p93, %s12, 1
      %s95 = smul.addr %s94, 2
      %s96 = smul.addr %s95, 8
      %s97 = scalar_lea.vmem %s0, %s96
      %p98 = pneg %p33
      %p99 = pneg %p30
      %p100 = pneg %p59
      %p101 = pneg %p56
      %p102 = scmp.lt.s32.totalorder %s12, 1
      %s103 = scalar_select %p102, %s12, 1
      %s104 = smul.addr %s103, 2
      %s105 = smul.addr %s104, 8
      %s106 = scalar_lea.vmem %s1, %s105
      %p107 = scmp.lt.s32.totalorder %s12, 1
      %s108 = scalar_select %p107, %s12, 1
      %s109 = smul.addr %s108, 2
      %s110 = smul.addr %s109, 8
      %s111 = scalar_lea.vmem %s0, %s110
      %p112 = scmp.lt.s32.totalorder %s12, 1
      %s113 = scalar_select %p112, %s12, 1
      %s114 = smul.addr %s113, 2
      %s115 = smul.addr %s114, 8
      %s116 = scalar_lea.vmem %s1, %s115
      %v117 = vld [vmem:[%s111] sm:$0x3f]
      %v118 = vld [vmem:[%s111 + $0x8] sm:$0x3f]
      %vm119 = vcmask 1045504
      %v120 = vsel %vm119, %v117, -inf
      %v121 = vrot.slane %v120, 4
      %v122 = vmax.f32 %v120, %v121
      %v123 = vrot.slane %v122, 2
      %v124 = vmax.f32 %v122, %v123
      %v125 = vrot.slane %v124, 1
      %v126 = vmax.f32 %v124, %v125
      %v127 = vsel %vm119, %v118, -inf
      %v128 = vrot.slane %v127, 4
      %v129 = vmax.f32 %v127, %v128
      %v130 = vrot.slane %v129, 2
      %v131 = vmax.f32 %v129, %v130
      %v132 = vrot.slane %v131, 1
      %v133 = vmax.f32 %v131, %v132
      %v134 = vsub.f32 %v117, %v126
      %v135 = vsub.f32 %v118, %v133
      %v136 = vmul.f32 %v134, 1.442695
      %v137 = vpow.pop %v136
      %v138 = vmul.f32 %v135, 1.442695
      %v139 = vpow.pop %v138
      %v140 = vsel %vm119, %v137, 0.0
      %v141 = vrot.slane %v140, 4
      %v142 = vadd.f32 %v140, %v141
      %v143 = vrot.slane %v142, 2
      %v144 = vadd.f32 %v142, %v143
      %v145 = vrot.slane %v144, 1
      %v146 = vadd.f32 %v144, %v145
      %v147 = vsel %vm119, %v139, 0.0
      %v148 = vrot.slane %v147, 4
      %v149 = vadd.f32 %v147, %v148
      %v150 = vrot.slane %v149, 2
      %v151 = vadd.f32 %v149, %v150
      %v152 = vrot.slane %v151, 1
      %v153 = vadd.f32 %v151, %v152
      %v154 = vrcp.pop %v146
      %v155 = vrcp.pop %v153
      %v156 = vmul.f32 %v137, %v154
      %v157 = vmul.f32 %v139, %v155
      %158 = vst [vmem:[%s116] sm:$0x3f] %v156
      %159 = vst [vmem:[%s116 + $0x8] sm:$0x3f] %v157
      %p160 = scmp.lt.s32.totalorder %s12, 1
      %s161 = scalar_select %p160, %s12, 1
      %s162 = smul.addr %s161, 2
      %s163 = smul.addr %s162, 8
      %s164 = scalar_lea.vmem %s1, %s163
      // Predicated region
      $region25: #{tpu_custom_call.1} parent=23 // pred_check
        %p165 = pneg %p56
      $region26: #{tpu_custom_call.1} parent=23 // pred_check_branch
        %167 = sbr.rel (%p165) target = $region28
      $region27: #{tpu_custom_call.1} parent=23 // pred_region
        _
      $region28: #{tpu_custom_call.1} parent=23 // pred_fallthru
        _
    $region24: #{tpu_custom_call.1} parent=5 // pred_fallthru
      _
    %p168 = scmp.le.s32.totalorder 2, %s7
    // Predicated region
    $region29: #{tpu_custom_call.1} parent=5 // pred_check
      %p169 = pneg %p168
    $region30: #{tpu_custom_call.1} parent=5 // pred_check_branch
      %171 = sbr.rel (%p169) target = $region32
    $region31: #{tpu_custom_call.1} parent=5 // pred_region
      %s172 = ssub.s32 %s7, 2
      // Predicated region
      $region33: #{tpu_custom_call.1} parent=31 // pred_check
        %p173 = pneg %p62
      $region34: #{tpu_custom_call.1} parent=31 // pred_check_branch
        %175 = sbr.rel (%p173) target = $region36
      $region35: #{tpu_custom_call.1} parent=31 // pred_region
        %p176 = scmp.lt.s32.totalorder %s13, 1
        %s177 = scalar_select %p176, %s13, 1
        %s178 = smul.addr %s177, 2
        %s179 = smul.addr %s178, 8
        %s180 = scalar_lea.vmem %s1, %s179
      $region36: #{tpu_custom_call.1} parent=31 // pred_fallthru
        _
    $region32: #{tpu_custom_call.1} parent=5 // pred_fallthru
      _
  $region6: #{tpu_custom_call.1} parent=0 // loop_footer
    %s11 = sadd.s32 1, %s7
  $region7: #{tpu_custom_call.1} parent=0 // loop_footer_branch
    %6 = sbr.rel target = $region3
  $region8: #{tpu_custom_call.1} parent=0 // loop_exit
    _

</llo_original>
